<compile_context>
chip_gen: v7x
topology: tpu7x:2x2x1
jax: 0.10.0
libtpu: 0.0.40
codegen_flags: <defaults>
</compile_context>

<pallas_src>
import jax
import jax.numpy as jnp
from jax.experimental import pallas as pl
from jax.experimental.pallas import tpu as pltpu


def _round_up(x, m):
    return (x + m - 1) // m * m


def _gaussian_diff_kernel(z_ref, mean_ref, out_ref):
    # z_ref:    (TB, D)     in VMEM
    # mean_ref: (1, C*D)    in VMEM (flattened mean, resident across the grid)
    # out_ref:  (TB, C*D)   in VMEM (lane-dense output slab)
    tb, d = z_ref.shape
    c = out_ref.shape[1] // d
    z = z_ref[...]                      # load once, reuse for every class
    for ci in range(c):                 # static unroll; ref slices are views
        lo = ci * d
        # (1, D) mean slice broadcasts in-register against the (TB, D) z tile.
        out_ref[:, lo:lo + d] = (z - mean_ref[:, lo:lo + d]).astype(out_ref.dtype)


def _pick_tb_and_vmem(B, C, D, z_dtype, out_dtype):
    """Generation-aware batch tile and scoped-VMEM limit."""
    try:
        phys_vmem = int(pltpu.get_tpu_info().vmem_capacity_bytes)
    except Exception:
        phys_vmem = 64 * 1024 * 1024  # conservative: v7x has 64 MiB per TC
    # Leave ~25% of physical VMEM for the resident mean + compiler scratch.
    vmem_limit = min(phys_vmem * 3 // 4, 96 * 1024 * 1024)

    in_bytes = jnp.dtype(z_dtype).itemsize
    out_bytes = jnp.dtype(out_dtype).itemsize
    # Double-buffered z tile + double-buffered out tile per batch row.
    per_row = 2 * (D * in_bytes + C * D * out_bytes)
    usable = vmem_limit // 2            # extra headroom under the scoped limit
    tb = usable // max(per_row, 1)
    tb = max(8, min((tb // 8) * 8, 16384))
    tb = min(tb, _round_up(B, 8))       # never bigger than the (padded) batch
    return tb, vmem_limit


def gaussian_forward(z, mean, *, tb=None, out_dtype=None, use_pallas=None):
    """Compute z[:, None, :] - mean[None, :, :] -> (B, C, D).

    z:    (B, D)
    mean: (C, D)
    """
    B, D = z.shape
    C, Dm = mean.shape
    assert D == Dm, "latent dims must match"
    out_dtype = out_dtype if out_dtype is not None else z.dtype

    # Small-shape fallback: at the module's tiny default sizes, XLA's fused
    # broadcast-subtract beats kernel launch + pipeline prologue overhead.
    out_total_bytes = B * C * D * jnp.dtype(out_dtype).itemsize
    if use_pallas is None:
        use_pallas = out_total_bytes >= (2 << 20)
    if not use_pallas:
        return (z[:, None, :] - mean[None, :, :]).astype(out_dtype)

    auto_tb, vmem_limit = _pick_tb_and_vmem(B, C, D, z.dtype, out_dtype)
    if tb is None:
        tb = auto_tb
    else:
        tb = max(8, (int(tb) // 8) * 8)
        tb = min(tb, _round_up(B, 8))

    # Flatten mean to a single lane-dense row (free row-major reshape).
    mean_flat = mean.reshape(1, C * D)

    grid = (pl.cdiv(B, tb),)            # Pallas masks the final partial block
    in_itemsize = jnp.dtype(z.dtype).itemsize
    cost = pl.CostEstimate(
        flops=int(B * C * D),
        transcendentals=0,
        bytes_accessed=int(B * D * in_itemsize
                           + C * D * in_itemsize
                           + out_total_bytes),
    )

    out_flat = pl.pallas_call(
        _gaussian_diff_kernel,
        out_shape=jax.ShapeDtypeStruct((B, C * D), out_dtype),
        grid_spec=pl.GridSpec(
            grid=grid,
            in_specs=[
                pl.BlockSpec((tb, D), lambda i: (i, 0)),      # z tile
                pl.BlockSpec((1, C * D), lambda i: (0, 0)),   # mean, resident
            ],
            out_specs=pl.BlockSpec((tb, C * D), lambda i: (i, 0)),
        ),
        compiler_params=pltpu.CompilerParams(
            dimension_semantics=("parallel",),   # shard B over v7x's 2 TCs
            vmem_limit_bytes=vmem_limit,
        ),
        cost_estimate=cost,
    )(z, mean_flat)

    # Metadata-only reshape: (B, C*D) -> (B, C, D), no extra HBM pass.
    return out_flat.reshape(B, C, D)


class MultiGaussianPallas:
    """JAX/Pallas equivalent of the PyTorch Multi_Gaussian module."""

    def __init__(self, num_classes, latent_dim, view_number):
        self.num_classes = num_classes
        self.latent_dim = latent_dim
        self.view_number = view_number
        D = view_number * latent_dim
        # Match PyTorch: means initialized to zeros.
        self.means = [jnp.zeros((num_classes, D), dtype=jnp.float32)
                      for _ in range(view_number)]

    def __call__(self, z, index, *, use_pallas=None):
        # `index` must be a static Python int (mirrors ModuleList indexing).
        return gaussian_forward(z, self.means[index], use_pallas=use_pallas)


if __name__ == "__main__":
    # Small shapes consistent with the module.
    num_classes = 4
    latent_dim = 32
    view_number = 2
    batch = 8
    D = view_number * latent_dim  # 64

    key = jax.random.PRNGKey(0)
    k_param, k_z, k_z2 = jax.random.split(key, 3)

    model = MultiGaussianPallas(num_classes, latent_dim, view_number)
    # Give view 1 non-trivial "trained" means so the subtraction is visible.
    model.means[1] = 0.01 * jax.random.normal(
        k_param, (num_classes, D), dtype=jnp.float32)

    z = jax.random.normal(k_z, (batch, D), dtype=jnp.float32)

    # 1) Force the Pallas kernel path (small shapes would otherwise take the
    #    XLA fallback) and check against a plain-JAX reference.
    out = jax.block_until_ready(model(z, index=1, use_pallas=True))
    ref = z[:, None, :] - model.means[1][None, :, :]
    assert out.shape == (batch, num_classes, D)
    assert jnp.allclose(out, ref, atol=1e-6, rtol=1e-6)

    # 2) Zero-mean view (matches PyTorch's init) through the kernel.
    out0 = jax.block_until_ready(model(z, index=0, use_pallas=True))
    assert jnp.allclose(out0, jnp.broadcast_to(z[:, None, :], out0.shape),
                        atol=1e-6, rtol=1e-6)

    # 3) Partial final block (B not a multiple of TB): no padding / no slice,
    #    Pallas masks the last block.
    z2 = jax.random.normal(k_z2, (12, D), dtype=jnp.float32)
    out2 = jax.block_until_ready(
        gaussian_forward(z2, model.means[1], tb=8, use_pallas=True))
    ref2 = z2[:, None, :] - model.means[1][None, :, :]
    assert out2.shape == (12, num_classes, D)
    assert jnp.allclose(out2, ref2, atol=1e-6, rtol=1e-6)

    # 4) Default path at tiny shapes takes the XLA fallback; same result.
    out_fb = jax.block_until_ready(model(z, index=1))
    assert jnp.allclose(out_fb, ref, atol=1e-6, rtol=1e-6)

    print("KERNEL_OK")
</pallas_src>

<mosaic_0001>
module attributes {stable_mosaic.version = 11 : i64} {
  func.func @_gaussian_diff_kernel(%arg0: i32, %arg1: memref<8x64xf32, #tpu.memory_space<vmem>>, %arg2: memref<1x256xf32, #tpu.memory_space<vmem>>, %arg3: memref<8x256xf32, #tpu.memory_space<vmem>>) attributes {dimension_semantics = [#tpu.dimension_semantics<parallel>], iteration_bounds = array<i64: 1>, scalar_prefetch = 0 : i64, scratch_operands = 0 : i64, tpu.core_type = #tpu.core_type<tc>, window_params = [{transform_indices = @transform_0, window_bounds = array<i64: 8, 64>}, {pipeline_mode = #tpu.pipeline_mode<synchronous>, transform_indices = @transform_1, window_bounds = array<i64: 1, 256>}, {transform_indices = @transform_2, window_bounds = array<i64: 8, 256>}]} {
    %c0 = arith.constant 0 : index
    %c0_0 = arith.constant 0 : index
    %0 = vector.load %arg1[%c0, %c0_0] : memref<8x64xf32, #tpu.memory_space<vmem>>, vector<8x64xf32>
    %c0_1 = arith.constant 0 : index
    %c0_2 = arith.constant 0 : index
    %1 = vector.load %arg2[%c0_1, %c0_2] : memref<1x256xf32, #tpu.memory_space<vmem>>, vector<1x64xf32>
    %2 = vector.broadcast %1 : vector<1x64xf32> to vector<8x64xf32>
    %3 = arith.subf %0, %2 : vector<8x64xf32>
    %c0_3 = arith.constant 0 : index
    %c0_4 = arith.constant 0 : index
    %4 = vector.load %arg3[%c0_3, %c0_4] : memref<8x256xf32, #tpu.memory_space<vmem>>, vector<8x64xf32>
    tpu.vector_store %arg3[%c0_3, %c0_4], %3 {strides = array<i32>} : memref<8x256xf32, #tpu.memory_space<vmem>>, vector<8x64xf32>,
    %c0_5 = arith.constant 0 : index
    %c64 = arith.constant 64 : index
    %5 = vector.load %arg2[%c0_5, %c64] : memref<1x256xf32, #tpu.memory_space<vmem>>, vector<1x64xf32>
    %6 = vector.broadcast %5 : vector<1x64xf32> to vector<8x64xf32>
    %7 = arith.subf %0, %6 : vector<8x64xf32>
    %c0_6 = arith.constant 0 : index
    %c64_7 = arith.constant 64 : index
    %8 = vector.load %arg3[%c0_6, %c64_7] : memref<8x256xf32, #tpu.memory_space<vmem>>, vector<8x64xf32>
    tpu.vector_store %arg3[%c0_6, %c64_7], %7 {strides = array<i32>} : memref<8x256xf32, #tpu.memory_space<vmem>>, vector<8x64xf32>,
    %c0_8 = arith.constant 0 : index
    %c128 = arith.constant 128 : index
    %9 = vector.load %arg2[%c0_8, %c128] : memref<1x256xf32, #tpu.memory_space<vmem>>, vector<1x64xf32>
    %10 = vector.broadcast %9 : vector<1x64xf32> to vector<8x64xf32>
    %11 = arith.subf %0, %10 : vector<8x64xf32>
    %c0_9 = arith.constant 0 : index
    %c128_10 = arith.constant 128 : index
    %12 = vector.load %arg3[%c0_9, %c128_10] : memref<8x256xf32, #tpu.memory_space<vmem>>, vector<8x64xf32>
    tpu.vector_store %arg3[%c0_9, %c128_10], %11 {strides = array<i32>} : memref<8x256xf32, #tpu.memory_space<vmem>>, vector<8x64xf32>,
    %c0_11 = arith.constant 0 : index
    %c192 = arith.constant 192 : index
    %13 = vector.load %arg2[%c0_11, %c192] : memref<1x256xf32, #tpu.memory_space<vmem>>, vector<1x64xf32>
    %14 = vector.broadcast %13 : vector<1x64xf32> to vector<8x64xf32>
    %15 = arith.subf %0, %14 : vector<8x64xf32>
    %c0_12 = arith.constant 0 : index
    %c192_13 = arith.constant 192 : index
    %16 = vector.load %arg3[%c0_12, %c192_13] : memref<8x256xf32, #tpu.memory_space<vmem>>, vector<8x64xf32>
    tpu.vector_store %arg3[%c0_12, %c192_13], %15 {strides = array<i32>} : memref<8x256xf32, #tpu.memory_space<vmem>>, vector<8x64xf32>,
    return
  }
  func.func @transform_0(%arg0: i32) -> (i32, i32) {
    %c0_i32 = arith.constant 0 : i32
    %c0_i32_0 = arith.constant 0 : i32
    return %arg0, %c0_i32 : i32, i32
  }
  func.func @transform_1(%arg0: i32) -> (i32, i32) {
    %c0_i32 = arith.constant 0 : i32
    %c0_i32_0 = arith.constant 0 : i32
    %c0_i32_1 = arith.constant 0 : i32
    return %c0_i32, %c0_i32_0 : i32, i32
  }
  func.func @transform_2(%arg0: i32) -> (i32, i32) {
    %c0_i32 = arith.constant 0 : i32
    %c0_i32_0 = arith.constant 0 : i32
    return %arg0, %c0_i32 : i32, i32
  }
}

</mosaic_0001>

<llo_original>
// kernel: tpu_custom_call.1
$region0: #{tpu_custom_call.1}
  #allocation0 [shape = 'u32[]', space=smem, size = 0x4, offset = 0x4, fixed_abs, tag = 'smem constant byte address 0x4 - core index']
  #allocation1 [shape = 'u32[144,128]{1,0:T(1,128)}', space=vmem, size = 0x12000, scoped, tag = 'internal scratch']
  %s0 = inlined_call_operand.hbm [shape: f32[8,64], index: 0, kind: input, shape index: {}]
  %s1 = inlined_call_operand.vmem [shape: f32[1,256], index: 1, kind: input, shape index: {}]
  %s2 = inlined_call_operand.hbm [shape: f32[8,256], index: 2, kind: output, shape index: {}]
  %s3 = sld [smem:[#allocation0]]
  $region22: #{tpu_custom_call.1} parent=0
    _
  %s5 = ssub.s32 1, %s3
  %s6 = scalar_select 0, %s5, %s3
  $region1: #{tpu_custom_call.1} parent=0
    #allocation2 [shape = 'u8[4096]{0}', space=vmem, size = 0x1000, scoped, tag = 'input window, operand 0, single buffered']
    #allocation3 [shape = 's32[1]{0}', space=sflag, size = 0x4, scoped, tag = 'scoped memory for tpu_custom_call.1']
    #allocation4 [shape = 's32[1]{0}', space=sflag, size = 0x4, scoped, tag = 'scoped memory for tpu_custom_call.1']
    #allocation5 [shape = 'u8[8192]{0}', space=vmem, size = 0x2000, scoped, tag = 'output window, operand 0, single buffered']
    %7 = vsyncpa [#allocation3], 0
    %8 = vsyncpa [#allocation4], 0
    // Predicated region
    $region2: #{tpu_custom_call.1} parent=1 // pred_check
      _
    $region3: #{tpu_custom_call.1} parent=1 // pred_check_branch
      %10 = sbr.rel (0) target = $region5
    $region4: #{tpu_custom_call.1} parent=1 // pred_region
      %s12 = ssub.s32 128, 128
      %13 = vsyncadd [#allocation3], %s12
      %s15 = sshll.u32 [#allocation2], 4
      %s16 = int_to_ptr.vmem [resolvable:$true] %s15
      %18 = dma.hbm_to_vmem [thread:$0]  %s0, 128, %s16, [#allocation3]
    $region5: #{tpu_custom_call.1} parent=1 // pred_fallthru
      _
    // Predicated region
    $region6: #{tpu_custom_call.1} parent=1 // pred_check
      _
    $region7: #{tpu_custom_call.1} parent=1 // pred_check_branch
      %20 = sbr.rel (0) target = $region9
    $region8: #{tpu_custom_call.1} parent=1 // pred_region
      _
    $region9: #{tpu_custom_call.1} parent=1 // pred_fallthru
      _
    // Predicated region
    $region10: #{tpu_custom_call.1} parent=1 // pred_check
      _
    $region11: #{tpu_custom_call.1} parent=1 // pred_check_branch
      %22 = sbr.rel (0) target = $region13
    $region12: #{tpu_custom_call.1} parent=1 // pred_region
      %23 = dma.done [#allocation3], 128
    $region13: #{tpu_custom_call.1} parent=1 // pred_fallthru
      _
    %v24 = vld [vmem:[#allocation2] sm:$0xff]
    %v25 = vld [vmem:[%s1] sm:$0x1]
    %v27 = vlaneseq
    %v28 = vshrl.u32 %v27, 7
    %v29 = vsub.s32 0, %v28
    %v30 = vrot.slane %v25, %v29
    %v32 = vsub.f32 %v24, %v30
    %vm33 = vcmask 523264
    %34 = vst.msk [vmem:[#allocation5] sm:$0xff] %vm33, %v32
    %v35 = vld [vmem:[%s1] sm:$0x1]
    %v37 = vlaneseq
    %v38 = vshrl.u32 %v37, 7
    %v39 = vsub.s32 0, %v38
    %v40 = vrot.slane %v35, %v39
    %41 = vrot.lane.b32.xlu0 %v40, 64
    %v42 = vpop.permute.xlu0 %41
    %v44 = vsub.f32 %v24, %v42
    %46 = vrot.lane.b32.xlu0 %v44, 64
    %v47 = vpop.permute.xlu0 %46
    %vm49 = vcmask 1048064
    %50 = vst.msk [vmem:[#allocation5] sm:$0xff] %vm49, %v47
    %v51 = vld [vmem:[%s1 + $0x1] sm:$0x1]
    %v53 = vlaneseq
    %v54 = vshrl.u32 %v53, 7
    %v55 = vsub.s32 0, %v54
    %v56 = vrot.slane %v51, %v55
    %v58 = vsub.f32 %v24, %v56
    %59 = vst.msk [vmem:[#allocation5 + $0x8] sm:$0xff] %vm33, %v58
    %v60 = vld [vmem:[%s1 + $0x1] sm:$0x1]
    %v62 = vlaneseq
    %v63 = vshrl.u32 %v62, 7
    %v64 = vsub.s32 0, %v63
    %v65 = vrot.slane %v60, %v64
    %66 = vrot.lane.b32.xlu0 %v65, 64
    %v67 = vpop.permute.xlu0 %66
    %v69 = vsub.f32 %v24, %v67
    %71 = vrot.lane.b32.xlu0 %v69, 64
    %v72 = vpop.permute.xlu0 %71
    %74 = vst.msk [vmem:[#allocation5 + $0x8] sm:$0xff] %vm49, %v72
    // Predicated region
    $region14: #{tpu_custom_call.1} parent=1 // pred_check
      _
    $region15: #{tpu_custom_call.1} parent=1 // pred_check_branch
      %76 = sbr.rel (0) target = $region17
    $region16: #{tpu_custom_call.1} parent=1 // pred_region
      %s78 = ssub.s32 256, 256
      %79 = vsyncadd [#allocation4], %s78
      %s81 = sshll.u32 [#allocation5], 4
      %s82 = int_to_ptr.vmem [resolvable:$true] %s81
      %84 = dma.vmem_to_hbm [thread:$0]  %s82, 256, %s2, [#allocation4]
    $region17: #{tpu_custom_call.1} parent=1 // pred_fallthru
      _
    // Predicated region
    $region18: #{tpu_custom_call.1} parent=1 // pred_check
      _
    $region19: #{tpu_custom_call.1} parent=1 // pred_check_branch
      %86 = sbr.rel (0) target = $region21
    $region20: #{tpu_custom_call.1} parent=1 // pred_region
      %87 = dma.done [#allocation4], 256
    $region21: #{tpu_custom_call.1} parent=1 // pred_fallthru
      _
    %88 = vsyncpa [#allocation3], 1
    %89 = vsyncpa [#allocation4], 1

</llo_original>
